<compile_context>
chip_gen: v7x
topology: tpu7x:2x2x1
jax: 0.10.0
libtpu: 0.0.40
codegen_flags: <defaults>
</compile_context>

<pallas_src>
import jax
import jax.numpy as jnp
from jax.experimental import pallas as pl
from jax.experimental.pallas import tpu as pltpu


def _round_up(x: int, m: int) -> int:
    return ((x + m - 1) // m) * m


def _cdiv(a: int, b: int) -> int:
    return (a + b - 1) // b


def _vmem_capacity_bytes() -> int:
    try:
        cap = int(pltpu.get_tpu_info().vmem_capacity_bytes)
        if cap > 0:
            return cap
    except Exception:
        pass
    return 64 << 20   # conservative fallback: v7x per-TC VMEM


def _vmem_cap_with_headroom() -> int:
    cap = _vmem_capacity_bytes()
    # never request the whole physical VMEM (leave room for compiler scratch):
    # 64 MiB -> 56 MiB, 128 MiB -> 120 MiB
    return max(cap - (8 << 20), (cap * 3) // 4)


# --------------------------------------------------------------------------
# Path 1: small-V one-hot @ table matmul on the MXU
# --------------------------------------------------------------------------

def _make_matmul_kernel(single_v_tile: bool):
    def kernel(ids_ref, emb_ref, out_ref):
        # ids_ref : (TN, 1) int32 ; emb_ref : (TV, E) ; out_ref : (TN, E)
        tv = emb_ref.shape[0]
        tn = out_ref.shape[0]

        ids = ids_ref[...]                                      # (TN, 1)
        if not single_v_tile:
            # Offset the small (TN,1) side, not the (TN,TV) iota (one vreg of
            # VPU work instead of TN*TV elements per grid step).
            ids = ids - pl.program_id(1) * tv

        iota = jax.lax.broadcasted_iota(jnp.int32, (tn, tv), 1)
        one_hot = (iota == ids).astype(emb_ref.dtype)           # exact 0/1
        tile = jnp.dot(one_hot, emb_ref[...],
                       preferred_element_type=jnp.float32).astype(out_ref.dtype)

        if single_v_tile:
            out_ref[...] = tile
        else:
            # Output block is resident across the V reduction axis (its
            # index_map returns (i, 0) for every k) -> accumulate in place.
            # Exact: all but one V tile contribute exact zeros.
            @pl.when(pl.program_id(1) == 0)
            def _():
                out_ref[...] = jnp.zeros_like(out_ref)

            out_ref[...] += tile

    return kernel


def _matmul_embed(ids_2d, weight_p, *, tn, tv, n_pad, v_pad, E, out_dtype):
    nk = v_pad // tv
    single = (nk == 1)
    itemsize = jnp.dtype(out_dtype).itemsize

    # Constant table block across the grid -> single pipeline buffer.
    table_kwargs = {"pipeline_mode": pl.Buffered(1)} if single else {}

    est_bytes = (
        tv * E * itemsize * (1 if single else 2)   # table tile buffer(s)
        + 2 * tn * E * itemsize                    # double-buffered output block
        + 2 * tn * 128 * 4                         # ids block (lane padded)
        + tn * tv * 4                              # one-hot intermediate
    )
    vmem_limit = int(min(max(2 * est_bytes, 32 << 20), _vmem_cap_with_headroom()))

    n_token_blocks = n_pad // tn
    table_reads = 1 if single else n_token_blocks  # non-resident table is re-read
    cost = pl.CostEstimate(
        flops=2 * n_pad * v_pad * E,
        transcendentals=0,
        bytes_accessed=table_reads * v_pad * E * itemsize
        + n_pad * 4 + n_pad * E * itemsize,
    )

    return pl.pallas_call(
        _make_matmul_kernel(single),
        out_shape=jax.ShapeDtypeStruct((n_pad, E), out_dtype),
        grid_spec=pltpu.PrefetchScalarGridSpec(
            num_scalar_prefetch=0,
            grid=(n_token_blocks, nk),
            in_specs=[
                pl.BlockSpec((tn, 1), lambda i, k: (i, 0)),               # ids
                pl.BlockSpec((tv, E), lambda i, k: (k, 0), **table_kwargs),  # table
            ],
            out_specs=pl.BlockSpec((tn, E), lambda i, k: (i, 0)),
        ),
        compiler_params=pltpu.CompilerParams(
            # token axis parallel (megacore), vocab axis is a reduction
            dimension_semantics=("parallel", "arbitrary"),
            vmem_limit_bytes=vmem_limit,
        ),
        cost_estimate=cost,
    )(ids_2d, weight_p)


# --------------------------------------------------------------------------
# Path 2: large-V HBM row gather (DMA per token row, ring of in-flight copies)
# --------------------------------------------------------------------------

_N_INFLIGHT = 8   # power of two: in-flight row-DMA ring depth


def _gather_kernel(ids_ref, table_ref, out_ref, sem):
    # ids_ref  : SMEM (n_pad,) int32   (scalar prefetch)
    # table_ref: HBM  (V, E)           (memory_space=pl.ANY)
    # out_ref  : VMEM (TN, E)          rows are DMA'd directly into this block
    # sem      : DMA semaphore ring of _N_INFLIGHT
    tn = out_ref.shape[0]
    base = pl.program_id(0) * tn

    def issue(t, slot):
        tok = ids_ref[base + t]
        pltpu.make_async_copy(table_ref.at[tok], out_ref.at[t],
                              sem.at[slot]).start()

    # prime the ring (static unrolled loop)
    for t in range(min(_N_INFLIGHT, tn)):
        issue(t, t % _N_INFLIGHT)

    @pl.loop(0, tn)
    def _(t):
        slot = t & (_N_INFLIGHT - 1)
        # wait for row t (descriptor slices are shape-matching placeholders)
        pltpu.make_async_copy(table_ref.at[0], out_ref.at[0],
                              sem.at[slot]).wait()

        @pl.when(t + _N_INFLIGHT < tn)
        def _():
            issue(t + _N_INFLIGHT, slot)


def _gather_embed(ids_flat, weight, *, tn, n_pad, E, out_dtype):
    n_token_blocks = n_pad // tn
    itemsize = jnp.dtype(out_dtype).itemsize
    cost = pl.CostEstimate(
        flops=0,
        transcendentals=0,
        bytes_accessed=2 * n_pad * E * itemsize + n_pad * 4,
    )
    vmem_limit = int(min(32 << 20, _vmem_cap_with_headroom()))

    return pl.pallas_call(
        _gather_kernel,
        out_shape=jax.ShapeDtypeStruct((n_pad, E), out_dtype),
        grid_spec=pltpu.PrefetchScalarGridSpec(
            num_scalar_prefetch=1,                     # ids -> SMEM
            grid=(n_token_blocks,),
            in_specs=[pl.BlockSpec(memory_space=pl.ANY)],   # table stays in HBM
            out_specs=pl.BlockSpec((tn, E), lambda i, ids: (i, 0)),
            scratch_shapes=[pltpu.SemaphoreType.DMA((_N_INFLIGHT,))],
        ),
        compiler_params=pltpu.CompilerParams(
            dimension_semantics=("parallel",),
            vmem_limit_bytes=vmem_limit,
        ),
        cost_estimate=cost,
    )(ids_flat, weight)


# --------------------------------------------------------------------------
# Public wrapper (== VocabularyEmbedder.forward)
# --------------------------------------------------------------------------

def vocabulary_embedder(wordtypes: jax.Array, weight: jax.Array, *,
                        token_tile: int = 256, vocab_tile: int = 2048,
                        min_gather_vocab: int = 2048) -> jax.Array:
    """Pallas equivalent of VocabularyEmbedder.forward (nn.Embedding lookup)."""
    B, S = wordtypes.shape
    V, E = weight.shape
    out_dtype = weight.dtype

    # ---- token-axis tiling: multiple of 8, minimal pad waste, and >=2 grid
    #      steps whenever possible so both v7x TensorCores get work.
    n = B * S
    token_tile = max(8, (int(token_tile) // 8) * 8)
    g = max(2, _cdiv(n, token_tile))
    tn = max(8, min(token_tile, _round_up(_cdiv(n, g), 8)))
    n_pad = _round_up(n, tn)

    ids_flat = wordtypes.reshape(n).astype(jnp.int32)
    if n_pad != n:
        ids_flat = jnp.pad(ids_flat, (0, n_pad - n))   # pad token 0 (discarded)

    if V >= min_gather_vocab:
        # HBM-bandwidth-bound row gather: O(N*E) bytes, independent of V.
        # Clamp ids so a bad id can never DMA out of range (nn.Embedding would
        # raise; here it reads row V-1 — documented divergence).
        ids_safe = jnp.clip(ids_flat, 0, V - 1)
        out = _gather_embed(ids_safe, weight, tn=tn, n_pad=n_pad, E=E,
                            out_dtype=out_dtype)
    else:
        # MXU one-hot matmul path. Out-of-range ids yield zero rows here.
        tv = min(max(8, (int(vocab_tile) // 8) * 8), _round_up(V, 8))
        v_pad = _round_up(V, tv)
        weight_p = weight
        if v_pad != V:
            weight_p = jnp.pad(weight, ((0, v_pad - V), (0, 0)))
        ids_2d = ids_flat.reshape(n_pad, 1)
        out = _matmul_embed(ids_2d, weight_p, tn=tn, tv=tv, n_pad=n_pad,
                            v_pad=v_pad, E=E, out_dtype=out_dtype)

    return out[:n].reshape(B, S, E)


def make_embedding_weight(key: jax.Array, vocab_size: int,
                          embed_dim: int) -> jax.Array:
    # nn.init.xavier_normal_: std = sqrt(2 / (fan_in + fan_out))
    std = (2.0 / (vocab_size + embed_dim)) ** 0.5
    return std * jax.random.normal(key, (vocab_size, embed_dim), jnp.float32)


if __name__ == "__main__":
    key = jax.random.PRNGKey(0)
    k_w, k_ids = jax.random.split(key)

    VOCAB = 256          # tokenizer.get_vocabulary_size()
    EMBED = 128          # word_embedding_size
    B, S = 2, 8          # batch of token-id sequences

    weight = make_embedding_weight(k_w, VOCAB, EMBED)
    wordtypes = jax.random.randint(k_ids, (B, S), 0, VOCAB, dtype=jnp.int32)

    # reference == nn.Embedding semantics (plain row gather)
    ref = weight[wordtypes]

    # 1) small-V MXU path (single resident, single-buffered V tile)
    out = jax.block_until_ready(vocabulary_embedder(wordtypes, weight))
    assert out.shape == (B, S, EMBED)
    assert jnp.allclose(out, ref, atol=1e-6), "mismatch (MXU path)"

    # 2) multi-V-tile reduction path (accumulates directly into output block)
    out2 = jax.block_until_ready(
        vocabulary_embedder(wordtypes, weight, token_tile=8, vocab_tile=128))
    assert jnp.allclose(out2, ref, atol=1e-6), "mismatch (V-tiled MXU path)"

    # 3) HBM DMA row-gather path (forced here; default kicks in at V >= 2048)
    out3 = jax.block_until_ready(
        vocabulary_embedder(wordtypes, weight, min_gather_vocab=1))
    assert jnp.allclose(out3, ref, atol=1e-6), "mismatch (DMA gather path)"

    print("KERNEL_OK")
</pallas_src>

<mosaic_0001>
module attributes {stable_mosaic.version = 11 : i64} {
  func.func @kernel(%arg0: i32, %arg1: i32, %arg2: memref<8x1xi32, #tpu.memory_space<vmem>>, %arg3: memref<256x128xf32, #tpu.memory_space<vmem>>, %arg4: memref<8x128xf32, #tpu.memory_space<vmem>>) attributes {dimension_semantics = [#tpu.dimension_semantics<parallel>, #tpu.dimension_semantics<arbitrary>], iteration_bounds = array<i64: 2, 1>, scalar_prefetch = 0 : i64, scratch_operands = 0 : i64, tpu.core_type = #tpu.core_type<tc>, window_params = [{transform_indices = @transform_0, window_bounds = array<i64: 8, 1>}, {pipeline_mode = #tpu.pipeline_mode<synchronous>, transform_indices = @transform_1, window_bounds = array<i64: 256, 128>}, {transform_indices = @transform_2, window_bounds = array<i64: 8, 128>}]} {
    %c0 = arith.constant 0 : index
    %c0_0 = arith.constant 0 : index
    %0 = vector.load %arg2[%c0, %c0_0] : memref<8x1xi32, #tpu.memory_space<vmem>>, vector<8x1xi32>
    %1 = tpu.iota {dimensions = array<i32: 1>} : vector<8x256xi32>
    %2 = vector.broadcast %0 : vector<8x1xi32> to vector<8x256xi32>
    %3 = arith.cmpi eq, %1, %2 : vector<8x256xi32>
    %4 = arith.extui %3 : vector<8x256xi1> to vector<8x256xi32>
    %5 = arith.sitofp %4 : vector<8x256xi32> to vector<8x256xf32>
    %c0_1 = arith.constant 0 : index
    %c0_2 = arith.constant 0 : index
    %6 = vector.load %arg3[%c0_1, %c0_2] : memref<256x128xf32, #tpu.memory_space<vmem>>, vector<256x128xf32>
    %cst = arith.constant dense<0.000000e+00> : vector<8x128xf32>
    %7 = tpu.matmul %5, %6, %cst {dimension_numbers = #tpu.dot_dimension_numbers<[1], [0], [0], [1], [0, 0, 1, 1], [], []>} : vector<8x256xf32>, vector<256x128xf32>, vector<8x128xf32> -> vector<8x128xf32>
    %c0_3 = arith.constant 0 : index
    %c0_4 = arith.constant 0 : index
    %8 = vector.load %arg4[%c0_3, %c0_4] : memref<8x128xf32, #tpu.memory_space<vmem>>, vector<8x128xf32>
    tpu.vector_store %arg4[%c0_3, %c0_4], %7 {strides = array<i32>} : memref<8x128xf32, #tpu.memory_space<vmem>>, vector<8x128xf32>,
    return
  }
  func.func @transform_0(%arg0: i32, %arg1: i32) -> (i32, i32) {
    %c0_i32 = arith.constant 0 : i32
    %c0_i32_0 = arith.constant 0 : i32
    return %arg0, %c0_i32 : i32, i32
  }
  func.func @transform_1(%arg0: i32, %arg1: i32) -> (i32, i32) {
    %c0_i32 = arith.constant 0 : i32
    %c0_i32_0 = arith.constant 0 : i32
    return %arg1, %c0_i32 : i32, i32
  }
  func.func @transform_2(%arg0: i32, %arg1: i32) -> (i32, i32) {
    %c0_i32 = arith.constant 0 : i32
    %c0_i32_0 = arith.constant 0 : i32
    return %arg0, %c0_i32 : i32, i32
  }
}

</mosaic_0001>

<llo_original>
// kernel: tpu_custom_call.1
$region0: #{tpu_custom_call.1}
  #allocation0 [shape = 'u32[]', space=smem, size = 0x4, offset = 0x4, fixed_abs, tag = 'smem constant byte address 0x4 - core index']
  #allocation1 [shape = 'u32[144,128]{1,0:T(1,128)}', space=vmem, size = 0x12000, scoped, tag = 'internal scratch']
  %s0 = inlined_call_operand.vmem [shape: s32[16,1], index: 0, kind: input, shape index: {}]
  %s1 = inlined_call_operand.hbm [shape: f32[256,128], index: 1, kind: input, shape index: {}]
  %s2 = inlined_call_operand.hbm [shape: f32[16,128], index: 2, kind: output, shape index: {}]
  %s3 = sld [smem:[#allocation0]]
  $region45: #{tpu_custom_call.1} parent=0
    _
  %s5 = ssub.s32 1, %s3
  %s6 = scalar_select 0, %s5, %s3
  $region1: #{tpu_custom_call.1} parent=0
    #allocation2 [shape = 'u8[131072]{0}', space=vmem, size = 0x20000, scoped, tag = 'input window, operand 1, single buffered']
    #allocation3 [shape = 's32[2]{0}', space=sflag, size = 0x8, scoped, tag = 'scoped memory for tpu_custom_call.1']
    #allocation4 [shape = 's32[2]{0}', space=sflag, size = 0x8, scoped, tag = 'scoped memory for tpu_custom_call.1']
    #allocation5 [shape = 'u8[8192]{0}', space=vmem, size = 0x2000, scoped, tag = 'output window, operand 0']
    %7 = vsyncpa [#allocation3], 0
    %8 = vsyncpa [#allocation4], 0
    %s9 = scalar_lea.sflag [#allocation4], 1
    %10 = vsyncpa %s9, 0
    loop: start=0, step=1, limit=4
    $region2: #{tpu_custom_call.1} parent=1 // loop_pre_header
      _
    $region3: #{tpu_custom_call.1} parent=1 // loop_header
      %s12 = sphi 0, %s16
      %p13 = scmp.ge.s32.totalorder %s12, 4
      %s19 = sphi 0, %s31
      %s20 = sphi 0, %s27
      %s21 = sphi 0, %s19
      %s22 = sphi 0, %s20
      %s23 = sphi 0, %s21
      %s24 = sphi 0, %s22
      %s34 = sphi 0, %s36
      %s37 = sphi 0, %s34
      %s38 = sphi 0, %s37
      %s54 = sphi 0, %s38
      %s60 = sphi 0, %s62
      %s63 = sphi 0, %s60
      %s64 = sphi 0, %s63
      %s80 = sphi 0, %s64
      %s86 = sphi 0, %s88
      %s89 = sphi 0, %s86
      %s90 = sphi 0, %s89
      %s106 = sphi 0, %s90
    $region4: #{tpu_custom_call.1} parent=1 // loop_header_branch
      %15 = sbr.rel (%p13) target = $region8
    $region5: #{tpu_custom_call.1} parent=1 // loop_body
      %s17 = ssub.s32 %s12, 1
      %s18 = ssub.s32 %s12, 2
      %s25 = sadd.s32 1, %s20
      %p26 = scmp.ge.s32.totalorder %s25, 1
      %s27 = scalar_select %p26, 0, %s25
      %s28 = sadd.s32 1, %s19
      %s29 = scalar_select %p26, %s28, %s19
      %p30 = scmp.ge.s32.totalorder %s29, 2
      %s31 = scalar_select %p30, 0, %s29
      %s32 = ssub.s32 %s19, %s31
      %p33 = scmp.eq.s32.totalorder %s32, 0
      %s35 = sadd.s32 %s34, 1
      %s36 = scalar_select %p33, %s34, %s35
      %p39 = pneg %p33
      %p40 = scmp.eq.s32.totalorder %s12, 1
      %p41 = por %p39, %p40
      %p42 = scmp.ne.s32.totalorder %s34, %s37
      %p43 = scmp.eq.s32.totalorder %s12, 0
      %p44 = por %p42, %p43
      %p45 = scmp.ne.s32.totalorder %s34, %s37
      %p46 = scmp.eq.s32.totalorder %s17, 1
      %p47 = por %p45, %p46
      %p48 = scmp.ne.s32.totalorder %s37, %s38
      %p49 = scmp.eq.s32.totalorder %s17, 0
      %p50 = por %p48, %p49
      %p51 = scmp.ne.s32.totalorder %s37, %s38
      %p52 = scmp.eq.s32.totalorder %s18, 1
      %p53 = por %p51, %p52
      %p55 = scmp.ne.s32.totalorder %s38, %s54
      %p56 = scmp.eq.s32.totalorder %s18, 0
      %p57 = por %p55, %p56
      %s58 = ssub.s32 %s20, %s27
      %p59 = scmp.eq.s32.totalorder %s58, 0
      %s61 = sadd.s32 %s60, 1
      %s62 = scalar_select %p59, %s60, %s61
      %p65 = pneg %p59
      %p66 = scmp.eq.s32.totalorder %s12, 1
      %p67 = por %p65, %p66
      %p68 = scmp.ne.s32.totalorder %s60, %s63
      %p69 = scmp.eq.s32.totalorder %s12, 0
      %p70 = por %p68, %p69
      %p71 = scmp.ne.s32.totalorder %s60, %s63
      %p72 = scmp.eq.s32.totalorder %s17, 1
      %p73 = por %p71, %p72
      %p74 = scmp.ne.s32.totalorder %s63, %s64
      %p75 = scmp.eq.s32.totalorder %s17, 0
      %p76 = por %p74, %p75
      %p77 = scmp.ne.s32.totalorder %s63, %s64
      %p78 = scmp.eq.s32.totalorder %s18, 1
      %p79 = por %p77, %p78
      %p81 = scmp.ne.s32.totalorder %s64, %s80
      %p82 = scmp.eq.s32.totalorder %s18, 0
      %p83 = por %p81, %p82
      %s84 = ssub.s32 %s19, %s31
      %p85 = scmp.eq.s32.totalorder %s84, 0
      %s87 = sadd.s32 %s86, 1
      %s88 = scalar_select %p85, %s86, %s87
      %p91 = pneg %p85
      %p92 = scmp.eq.s32.totalorder %s12, 1
      %p93 = por %p91, %p92
      %p94 = scmp.ne.s32.totalorder %s86, %s89
      %p95 = scmp.eq.s32.totalorder %s12, 0
      %p96 = por %p94, %p95
      %p97 = scmp.ne.s32.totalorder %s86, %s89
      %p98 = scmp.eq.s32.totalorder %s17, 1
      %p99 = por %p97, %p98
      %p100 = scmp.ne.s32.totalorder %s89, %s90
      %p101 = scmp.eq.s32.totalorder %s17, 0
      %p102 = por %p100, %p101
      %p103 = scmp.ne.s32.totalorder %s89, %s90
      %p104 = scmp.eq.s32.totalorder %s18, 1
      %p105 = por %p103, %p104
      %p107 = scmp.ne.s32.totalorder %s90, %s106
      %p108 = scmp.eq.s32.totalorder %s18, 0
      %p109 = por %p107, %p108
      %p110 = scmp.le.s32.totalorder 1, %s12
      %p111 = scmp.lt.s32.totalorder %s12, 3
      %p112 = pnand %p110, %p111
      %p113 = pneg %p112
      // Predicated region
      $region9: #{tpu_custom_call.1} parent=5 // pred_check
        _
      $region10: #{tpu_custom_call.1} parent=5 // pred_check_branch
        %115 = sbr.rel (%p112) target = $region12
      $region11: #{tpu_custom_call.1} parent=5 // pred_region
        %s116 = ssub.s32 %s12, 1
        // Predicated region
        $region13: #{tpu_custom_call.1} parent=11 // pred_check
          %p117 = pneg %p76
        $region14: #{tpu_custom_call.1} parent=11 // pred_check_branch
          %119 = sbr.rel (%p117) target = $region16
        $region15: #{tpu_custom_call.1} parent=11 // pred_region
          %s120 = smul.u32 32, %s22
          %s122 = ssub.s32 4096, 4096
          %123 = vsyncadd [#allocation3], %s122
          %s124 = smul.addr %s120, 128
          %s125 = scalar_lea.hbm %s1, %s124
          %s126 = sshll.u32 [#allocation2], 4
          %s127 = int_to_ptr.vmem [resolvable:$true] %s126
          %132 = dma.hbm_to_vmem [thread:$0]  %s125, 4096, %s127, [#allocation3], 128, 128, 8
        $region16: #{tpu_custom_call.1} parent=11 // pred_fallthru
          _
      $region12: #{tpu_custom_call.1} parent=5 // pred_fallthru
        _
      %p133 = scmp.lt.s32.totalorder %s12, 2
      // Predicated region
      $region17: #{tpu_custom_call.1} parent=5 // pred_check
        %p134 = pneg %p133
      $region18: #{tpu_custom_call.1} parent=5 // pred_check_branch
        %136 = sbr.rel (%p134) target = $region20
      $region19: #{tpu_custom_call.1} parent=5 // pred_region
        // Predicated region
        $region21: #{tpu_custom_call.1} parent=19 // pred_check
          %p137 = pneg %p44
        $region22: #{tpu_custom_call.1} parent=19 // pred_check_branch
          %139 = sbr.rel (%p137) target = $region24
        $region23: #{tpu_custom_call.1} parent=19 // pred_region
          %p140 = scmp.lt.s32.totalorder %s19, 1
          %s141 = scalar_select %p140, %s19, 1
          %s142 = smul.addr %s141, 8
          %s143 = scalar_lea.vmem %s0, %s142
        $region24: #{tpu_custom_call.1} parent=19 // pred_fallthru
          _
      $region20: #{tpu_custom_call.1} parent=5 // pred_fallthru
        _
      %p144 = scmp.le.s32.totalorder 1, %s12
      %p145 = scmp.lt.s32.totalorder %s12, 3
      %p146 = pnand %p144, %p145
      %p147 = pneg %p146
      // Predicated region
      $region25: #{tpu_custom_call.1} parent=5 // pred_check
        _
      $region26: #{tpu_custom_call.1} parent=5 // pred_check_branch
        %149 = sbr.rel (%p146) target = $region28
      $region27: #{tpu_custom_call.1} parent=5 // pred_region
        %s150 = ssub.s32 %s12, 1
        // Predicated region
        $region29: #{tpu_custom_call.1} parent=27 // pred_check
          %p151 = pneg %p76
        $region30: #{tpu_custom_call.1} parent=27 // pred_check_branch
          %153 = sbr.rel (%p151) target = $region32
        $region31: #{tpu_custom_call.1} parent=27 // pred_region
          %154 = dma.done [#allocation3], 4096
        $region32: #{tpu_custom_call.1} parent=27 // pred_fallthru
          _
        %p155 = scmp.lt.s32.totalorder %s21, 1
        %s156 = scalar_select %p155, %s21, 1
        %s157 = smul.addr %s156, 8
        %s158 = scalar_lea.vmem %s0, %s157
        %p159 = pneg %p50
        %p160 = pneg %p47
        %p161 = pneg %p76
        %p162 = pneg %p73
        %p163 = pneg %p102
        %p164 = pneg %p99
        %s165 = sand.u32 %s89, 1
        %s166 = scalar_lea.sflag [#allocation4], %s165
        %s167 = sand.u32 %s89, 1
        %s168 = smul.addr %s167, 8
        %s169 = scalar_lea.vmem [#allocation5], %s168
        %p170 = scmp.lt.s32.totalorder %s21, 1
        %s171 = scalar_select %p170, %s21, 1
        %s172 = smul.addr %s171, 8
        %s173 = scalar_lea.vmem %s0, %s172
        %s174 = smul.u32 32, %s22
        %v175 = vld [vmem:[%s173] sm:$0xff]
        %v176 = vlaneseq
        %v177 = vand.u32 %v176, 127
        %v178 = vadd.s32 %v177, 128
        %179 = vset.pattern.permute.xlu0 0
        %180 = vperm.xlu0 %179, %v175
        %v181 = vpop.permute.xlu0 %180
        %vm182 = vcmp.eq.s32.totalorder %v177, %v181
        %vm183 = vcmp.eq.s32.totalorder %v178, %v181
        %v184 = vsel %vm182, 1, 0
        %v185 = vsel %vm183, 1, 0
        %v186 = vcvt.s32.f32 %v184
        %v187 = vcvt.s32.f32 %v185
        %v188 = vld [vmem:[#allocation2] sm:$0xff]
        %v189 = vld [vmem:[#allocation2 + $0x8] sm:$0xff]
        %v190 = vld [vmem:[#allocation2 + $0x10] sm:$0xff]
        %v191 = vld [vmem:[#allocation2 + $0x18] sm:$0xff]
        %v192 = vld [vmem:[#allocation2 + $0x20] sm:$0xff]
        %v193 = vld [vmem:[#allocation2 + $0x28] sm:$0xff]
        %v194 = vld [vmem:[#allocation2 + $0x30] sm:$0xff]
        %v195 = vld [vmem:[#allocation2 + $0x38] sm:$0xff]
        %v196 = vld [vmem:[#allocation2 + $0x40] sm:$0xff]
        %v197 = vld [vmem:[#allocation2 + $0x48] sm:$0xff]
        %v198 = vld [vmem:[#allocation2 + $0x50] sm:$0xff]
        %v199 = vld [vmem:[#allocation2 + $0x58] sm:$0xff]
        %v200 = vld [vmem:[#allocation2 + $0x60] sm:$0xff]
        %v201 = vld [vmem:[#allocation2 + $0x68] sm:$0xff]
        %v202 = vld [vmem:[#allocation2 + $0x70] sm:$0xff]
        %v203 = vld [vmem:[#allocation2 + $0x78] sm:$0xff]
        %v204 = vld [vmem:[#allocation2 + $0x80] sm:$0xff]
        %v205 = vld [vmem:[#allocation2 + $0x88] sm:$0xff]
        %v206 = vld [vmem:[#allocation2 + $0x90] sm:$0xff]
        %v207 = vld [vmem:[#allocation2 + $0x98] sm:$0xff]
        %v208 = vld [vmem:[#allocation2 + $0xa0] sm:$0xff]
        %v209 = vld [vmem:[#allocation2 + $0xa8] sm:$0xff]
        %v210 = vld [vmem:[#allocation2 + $0xb0] sm:$0xff]
        %v211 = vld [vmem:[#allocation2 + $0xb8] sm:$0xff]
        %v212 = vld [vmem:[#allocation2 + $0xc0] sm:$0xff]
        %v213 = vld [vmem:[#allocation2 + $0xc8] sm:$0xff]
        %v214 = vld [vmem:[#allocation2 + $0xd0] sm:$0xff]
        %v215 = vld [vmem:[#allocation2 + $0xd8] sm:$0xff]
        %v216 = vld [vmem:[#allocation2 + $0xe0] sm:$0xff]
        %v217 = vld [vmem:[#allocation2 + $0xe8] sm:$0xff]
        %v218 = vld [vmem:[#allocation2 + $0xf0] sm:$0xff]
        %v219 = vld [vmem:[#allocation2 + $0xf8] sm:$0xff]
        %220 = vmatprep.subr.mxu0 0.0
        %221 = vmatpush1.msra.mxu0 %v188
        %222 = vmatprep.subr.mxu0 0.0
        %223 = vmatpush1.msra.mxu0 %v189
        %224 = vmatprep.subr.mxu0 0.0
        %225 = vmatpush1.msra.mxu0 %v190
        %226 = vmatprep.subr.mxu0 0.0
        %227 = vmatpush1.msra.mxu0 %v191
        %228 = vmatprep.subr.mxu0 0.0
        %229 = vmatpush1.msra.mxu0 %v192
        %230 = vmatprep.subr.mxu0 0.0
        %231 = vmatpush1.msra.mxu0 %v193
        %232 = vmatprep.subr.mxu0 0.0
        %233 = vmatpush1.msra.mxu0 %v194
        %234 = vmatprep.subr.mxu0 0.0
        %235 = vmatpush1.msra.mxu0 %v195
        %236 = vmatprep.subr.mxu0 0.0
        %237 = vmatpush1.msra.mxu0 %v196
        %238 = vmatprep.subr.mxu0 0.0
        %239 = vmatpush1.msra.mxu0 %v197
        %240 = vmatprep.subr.mxu0 0.0
        %241 = vmatpush1.msra.mxu0 %v198
        %242 = vmatprep.subr.mxu0 0.0
        %243 = vmatpush1.msra.mxu0 %v199
        %244 = vmatprep.subr.mxu0 0.0
        %245 = vmatpush1.msra.mxu0 %v200
        %246 = vmatprep.subr.mxu0 0.0
        %247 = vmatpush1.msra.mxu0 %v201
        %248 = vmatprep.subr.mxu0 0.0
        %249 = vmatpush1.msra.mxu0 %v202
        %250 = vmatprep.subr.mxu0 0.0
        %251 = vmatpush1.msra.mxu0 %v203
        %252 = vmatprep.subr.mxu0 0.0
        %253 = vmatpush1.msra.mxu0 %v204
        %254 = vmatprep.subr.mxu0 0.0
        %255 = vmatpush1.msra.mxu0 %v205
        %256 = vmatprep.subr.mxu0 0.0
        %257 = vmatpush1.msra.mxu0 %v206
        %258 = vmatprep.subr.mxu0 0.0
        %259 = vmatpush1.msra.mxu0 %v207
        %260 = vmatprep.subr.mxu0 0.0
        %261 = vmatpush1.msra.mxu0 %v208
        %262 = vmatprep.subr.mxu0 0.0
        %263 = vmatpush1.msra.mxu0 %v209
        %264 = vmatprep.subr.mxu0 0.0
        %265 = vmatpush1.msra.mxu0 %v210
        %266 = vmatprep.subr.mxu0 0.0
        %267 = vmatpush1.msra.mxu0 %v211
        %268 = vmatprep.subr.mxu0 0.0
        %269 = vmatpush1.msra.mxu0 %v212
        %270 = vmatprep.subr.mxu0 0.0
        %271 = vmatpush1.msra.mxu0 %v213
        %272 = vmatprep.subr.mxu0 0.0
        %273 = vmatpush1.msra.mxu0 %v214
        %274 = vmatprep.subr.mxu0 0.0
        %275 = vmatpush1.msra.mxu0 %v215
        %276 = vmatprep.subr.mxu0 0.0
        %277 = vmatpush1.msra.mxu0 %v216
        %278 = vmatprep.subr.mxu0 0.0
        %279 = vmatpush1.msra.mxu0 %v217
        %280 = vmatprep.subr.mxu0 0.0
        %281 = vmatpush1.msra.mxu0 %v218
        %282 = vmatprep.subr.mxu0 0.0
        %283 = vmatpush1.msra.mxu0 %v219
        %284 = vmatprep.mubr.f32.mxu0 %v187
        %285 = vmatmul.mubr.f32.gmra.mrb[0].mxu0 %v186
        %v286 = vpop.f32.mrb[0].mxu0
        %v287 = vadd.f32 0.0, %v286
        %v288 = vpop.f32.mrb[0].mxu0
        %289 = vdwg.mxu0
        %290 = vst [vmem:[%s169] sm:$0xff] %v287
        %s291 = sand.u32 %s89, 1
        %s292 = scalar_lea.sflag [#allocation4], %s291
        %s293 = sand.u32 %s89, 1
        %s294 = smul.addr %s293, 8
        %s295 = scalar_lea.vmem [#allocation5], %s294
        // Predicated region
        $region33: #{tpu_custom_call.1} parent=27 // pred_check
          %p296 = pneg %p99
        $region34: #{tpu_custom_call.1} parent=27 // pred_check_branch
          %298 = sbr.rel (%p296) target = $region36
        $region35: #{tpu_custom_call.1} parent=27 // pred_region
          %s300 = ssub.s32 128, 128
          %301 = vsyncadd %s292, %s300
          %s302 = smul.addr %s21, 128
          %s303 = scalar_lea.hbm %s2, %s302
          %s305 = sshll.u32 %s295, 4
          %s306 = int_to_ptr.vmem [resolvable:$true] %s305
          %308 = dma.vmem_to_hbm [thread:$0]  %s306, 128, %s303, %s292
        $region36: #{tpu_custom_call.1} parent=27 // pred_fallthru
          _
      $region28: #{tpu_custom_call.1} parent=5 // pred_fallthru
        _
      %p309 = scmp.le.s32.totalorder 2, %s12
      // Predicated region
      $region37: #{tpu_custom_call.1} parent=5 // pred_check
        %p310 = pneg %p309
      $region38: #{tpu_custom_call.1} parent=5 // pred_check_branch
        %312 = sbr.rel (%p310) target = $region40
      $region39: #{tpu_custom_call.1} parent=5 // pred_region
        %s313 = ssub.s32 %s12, 2
        // Predicated region
        $region41: #{tpu_custom_call.1} parent=39 // pred_check
          %p314 = pneg %p105
        $region42: #{tpu_custom_call.1} parent=39 // pred_check_branch
          %316 = sbr.rel (%p314) target = $region44
        $region43: #{tpu_custom_call.1} parent=39 // pred_region
          %s317 = sand.u32 %s90, 1
          %s318 = scalar_lea.sflag [#allocation4], %s317
          %s319 = sand.u32 %s90, 1
          %s320 = smul.addr %s319, 8
          %s321 = scalar_lea.vmem [#allocation5], %s320
          %322 = dma.done %s318, 128
        $region44: #{tpu_custom_call.1} parent=39 // pred_fallthru
          _
      $region40: #{tpu_custom_call.1} parent=5 // pred_fallthru
        _
    $region6: #{tpu_custom_call.1} parent=1 // loop_footer
      %s16 = sadd.s32 1, %s12
    $region7: #{tpu_custom_call.1} parent=1 // loop_footer_branch
      %11 = sbr.rel target = $region3
    $region8: #{tpu_custom_call.1} parent=1 // loop_exit
      _
    %323 = vsyncpa [#allocation3], 1
    %s324 = scalar_lea.sflag [#allocation3], 1
    %325 = vsyncpa %s324, 1
    %326 = vsyncpa [#allocation4], 1
    %s327 = scalar_lea.sflag [#allocation4], 1
    %328 = vsyncpa %s327, 1

</llo_original>
